<compile_context>
chip_gen: v5e
topology: v5e:2x2
jax: 0.10.0
libtpu: 0.0.40
codegen_flags: <defaults>
</compile_context>

<pallas_src>
from functools import partial

import jax
import jax.numpy as jnp
from jax.experimental import pallas as pl
from jax.experimental.pallas import tpu as pltpu


def _round_up(x, m):
    return (x + m - 1) // m * m


def _pick_cout_tile(Cout, HW):
    """Largest Cout tile (<=128) whose f32 matmul result stays modest."""
    cap = max(8, min(128, (256 * 1024) // (4 * HW)))
    if Cout <= cap:
        return Cout
    for t in range(cap, 0, -1):
        if Cout % t == 0 and t % 8 == 0:
            return t
    return Cout


def _pick_batch_tile(N, n_co, per_image_bytes,
                     target_bytes=512 * 1024, vmem_cap=4 * 1024 * 1024):
    """Largest batch tile that (a) keeps >=2 grid steps when possible (v7x has
    two TensorCores), (b) stays under a per-step VMEM budget and (c) stops
    growing once per-step DMAs are comfortably above pipeline overhead."""
    best = 1
    for d in range(1, N + 1):
        if N % d:
            continue
        if d * per_image_bytes > vmem_cap:
            break
        if (N // d) * n_co < 2 <= N * n_co:
            break           # never leave a v7x TensorCore idle
        best = d
        if d * per_image_bytes >= target_bytes:
            break
    return best


def _conv_bn_relu_kernel(x_ref, w_ref, cmask_ref, shift_ref, o_ref, col_ref, *,
                         K, W, HW, pad, cin_p, nb):
    """One (batch tile, Cout tile) per grid step.

    x_ref     : (NB, Cin_p, FLAT)   bf16  flattened H-padded images (+ slack)
    w_ref     : (TCO, K*K*Cin_p)    bf16  im2col weights, BN scale folded in
    cmask_ref : (K, HW)             bf16  1/0 column masks for the W boundary
    shift_ref : (TCO, 1)            f32   fused conv-bias + BN shift
    o_ref     : (NB, TCO, HW)       out   NCHW output block, spatial flattened
    col_ref   : (K*K*Cin_p, HW)     bf16  VMEM im2col scratch (reused per image)
    """
    cmask = cmask_ref[...]          # (K, HW), tiny; hoisted out of all loops
    w = w_ref[...]                  # (TCO, K*K*Cin_p)
    shift = shift_ref[...]          # (TCO, 1) f32

    for b in range(nb):
        # Build the im2col matrix: each tap is a lane-shifted slice of the
        # flattened image; wrapped W-boundary columns are zeroed by the mask,
        # folded into the scratch write so it never touches the matmul path.
        for kh in range(K):
            for kw in range(K):
                t = kh * K + kw
                patch = x_ref[b, :, pl.ds(kh * W + kw, HW)]      # (Cin_p, HW)
                if kw != pad:
                    patch = patch * cmask[kw:kw + 1, :]
                col_ref[t * cin_p:(t + 1) * cin_p, :] = patch

        # Single MXU matmul with contraction K*K*Cin_p (vs K*K tiny dots),
        # f32 accumulation; fused bias/BN shift + ReLU epilogue in f32.
        y = jnp.dot(w, col_ref[...], preferred_element_type=jnp.float32)
        y = jnp.maximum(y + shift, 0.0)
        o_ref[b] = y.astype(o_ref.dtype)


def conv_block_forward(x_nchw, params, *, kernel_size, stride=1, eps=1e-5,
                       compute_dtype=jnp.bfloat16, out_dtype=None):
    """Pallas implementation of ConvBlock.forward (eval mode). Input NCHW."""
    assert stride == 1, "only stride=1 implemented"
    K = kernel_size
    pad = K // 2

    w_oihw = params["weight"]          # (Cout, Cin, K, K)  torch layout
    bias = params["bias"]              # (Cout,)
    gamma = params["gamma"]            # (Cout,)
    beta = params["beta"]              # (Cout,)
    r_mean = params["running_mean"]    # (Cout,)
    r_var = params["running_var"]      # (Cout,)

    N, Cin, H, W = x_nchw.shape
    Cout = w_oihw.shape[0]
    HW = H * W
    Hp = H + 2 * pad
    out_dtype = x_nchw.dtype if out_dtype is None else out_dtype
    cd_bytes = jnp.dtype(compute_dtype).itemsize
    out_bytes = jnp.dtype(out_dtype).itemsize

    # Pad Cin to the packed-sublane tile so im2col scratch writes are aligned.
    sub_pack = 8 * (4 // cd_bytes)
    Cin_p = _round_up(Cin, sub_pack)

    # Fold BatchNorm scale into the conv weights; bias + BN shift -> one add.
    scale = (gamma / jnp.sqrt(r_var + eps)).astype(jnp.float32)
    shift = (bias - r_mean) * scale + beta
    w_scaled = w_oihw.astype(jnp.float32) * scale[:, None, None, None]
    w_scaled = jnp.pad(w_scaled, ((0, 0), (0, Cin_p - Cin), (0, 0), (0, 0)))
    # (Cout, Cin_p, K, K) -> (Cout, K*K*Cin_p); row order = tap-major, channel
    # minor, matching the im2col scratch row order in the kernel.
    w_im2col = jnp.transpose(w_scaled, (0, 2, 3, 1)).reshape(Cout, K * K * Cin_p)
    w_im2col = w_im2col.astype(compute_dtype)
    shift2 = shift.reshape(Cout, 1).astype(jnp.float32)

    # Flattened, H-only-padded image with `pad` zeros in front and slack zeros
    # at the back so every tap is a plain in-bounds lane slice of length H*W.
    max_shift = (K - 1) * W + (K - 1)
    flat_len = pad + Hp * W
    FLAT = _round_up(flat_len + max_shift, 128)
    xh = jnp.pad(x_nchw.astype(compute_dtype),
                 ((0, 0), (0, Cin_p - Cin), (pad, pad), (0, 0)))
    xflat = jnp.pad(xh.reshape(N, Cin_p, Hp * W),
                    ((0, 0), (0, 0), (pad, FLAT - flat_len)))

    # 1/0 column masks: tap column kw only contributes where 0 <= w+kw-pad < W.
    wcol = jnp.arange(HW, dtype=jnp.int32) % W
    kws = jnp.arange(K, dtype=jnp.int32)[:, None]
    cmask = (((wcol[None, :] + kws - pad) >= 0)
             & ((wcol[None, :] + kws - pad) < W)).astype(compute_dtype)

    # Tiling: Cout tile bounded by f32 result size; batch tile sized for big
    # DMAs while keeping >= 2 parallel grid steps (v7x dual TensorCore).
    TCO = _pick_cout_tile(Cout, HW)
    n_co = Cout // TCO
    per_image_bytes = Cin_p * FLAT * cd_bytes + TCO * HW * out_bytes
    NB = _pick_batch_tile(N, n_co, per_image_bytes)

    # VMEM budget: double-buffered blocks + im2col scratch, clamped for v7x.
    step_bytes = (2 * NB * Cin_p * FLAT * cd_bytes
                  + 2 * NB * TCO * HW * out_bytes
                  + 2 * TCO * K * K * Cin_p * cd_bytes
                  + 2 * K * HW * cd_bytes + 2 * TCO * 4
                  + K * K * Cin_p * HW * cd_bytes)
    vmem_limit = int(min(48 * 1024 * 1024, max(4 * step_bytes, 8 * 1024 * 1024)))

    kernel = partial(_conv_bn_relu_kernel, K=K, W=W, HW=HW, pad=pad,
                     cin_p=Cin_p, nb=NB)

    cost = pl.CostEstimate(
        flops=2 * N * HW * K * K * Cin * Cout,
        transcendentals=0,
        bytes_accessed=int(xflat.size * cd_bytes + w_im2col.size * cd_bytes
                           + N * Cout * HW * out_bytes))

    out_flat = pl.pallas_call(
        kernel,
        out_shape=jax.ShapeDtypeStruct((N, Cout, HW), out_dtype),
        grid_spec=pltpu.PrefetchScalarGridSpec(
            num_scalar_prefetch=0,
            grid=(N // NB, n_co),   # batch outer, Cout inner: x stays resident
            in_specs=[
                pl.BlockSpec((NB, Cin_p, FLAT), lambda n, co: (n, 0, 0)),
                pl.BlockSpec((TCO, K * K * Cin_p), lambda n, co: (co, 0)),
                pl.BlockSpec((K, HW), lambda n, co: (0, 0)),
                pl.BlockSpec((TCO, 1), lambda n, co: (co, 0)),
            ],
            out_specs=pl.BlockSpec((NB, TCO, HW), lambda n, co: (n, co, 0)),
            scratch_shapes=[pltpu.VMEM((K * K * Cin_p, HW), compute_dtype)],
        ),
        compiler_params=pltpu.CompilerParams(
            dimension_semantics=("parallel", "parallel"),
            vmem_limit_bytes=vmem_limit,
        ),
        cost_estimate=cost,
    )(xflat, w_im2col, cmask, shift2)

    # Output is already NCHW with spatial flattened -> free metadata reshape.
    return out_flat.reshape(N, Cout, H, W)


def _reference_forward(x_nchw, params, *, kernel_size, eps=1e-5):
    """Plain-JAX f32 reference (lax conv) for correctness checking."""
    pad = kernel_size // 2
    y = jax.lax.conv_general_dilated(
        x_nchw.astype(jnp.float32),
        params["weight"].astype(jnp.float32),
        window_strides=(1, 1),
        padding=((pad, pad), (pad, pad)),
        dimension_numbers=("NCHW", "OIHW", "NCHW"),
    )
    y = y + params["bias"].reshape(1, -1, 1, 1)
    scale = params["gamma"] / jnp.sqrt(params["running_var"] + eps)
    y = (y - params["running_mean"].reshape(1, -1, 1, 1)) * scale.reshape(1, -1, 1, 1)
    y = y + params["beta"].reshape(1, -1, 1, 1)
    return jnp.maximum(y, 0.0)


if __name__ == "__main__":
    # Small, deterministic example consistent with ConvBlock(4, 8, 3).
    N, Cin, Cout, H, W, K = 2, 4, 8, 16, 16, 3

    key = jax.random.PRNGKey(0)
    kx, kw, kb, kg, kbe, krm, krv = jax.random.split(key, 7)

    x = jax.random.normal(kx, (N, Cin, H, W), dtype=jnp.float32)
    params = {
        "weight": jax.random.normal(kw, (Cout, Cin, K, K), jnp.float32) * 0.1,
        "bias": jax.random.normal(kb, (Cout,), jnp.float32) * 0.1,
        "gamma": 1.0 + 0.1 * jax.random.normal(kg, (Cout,), jnp.float32),
        "beta": 0.1 * jax.random.normal(kbe, (Cout,), jnp.float32),
        "running_mean": 0.1 * jax.random.normal(krm, (Cout,), jnp.float32),
        "running_var": jnp.abs(1.0 + 0.1 * jax.random.normal(krv, (Cout,), jnp.float32)),
    }

    fwd = jax.jit(partial(conv_block_forward, kernel_size=K, stride=1))
    out = fwd(x, params)
    out = jax.block_until_ready(out)

    ref = _reference_forward(x, params, kernel_size=K)
    assert out.shape == (N, Cout, H, W)
    # bf16 MXU operands with f32 accumulation -> bf16-level tolerance vs f32 ref.
    assert jnp.allclose(out, ref, atol=5e-2, rtol=5e-2), "mismatch vs reference"

    print("KERNEL_OK")
</pallas_src>

<mosaic_0001>
module attributes {stable_mosaic.version = 11 : i64} {
  func.func @_conv_bn_relu_kernel(%arg0: i32, %arg1: i32, %arg2: memref<1x16x384xbf16, #tpu.memory_space<vmem>>, %arg3: memref<8x144xbf16, #tpu.memory_space<vmem>>, %arg4: memref<3x256xbf16, #tpu.memory_space<vmem>>, %arg5: memref<8x1xf32, #tpu.memory_space<vmem>>, %arg6: memref<1x8x256xf32, #tpu.memory_space<vmem>>, %arg7: memref<144x256xbf16, #tpu.memory_space<vmem>>) attributes {dimension_semantics = [#tpu.dimension_semantics<parallel>, #tpu.dimension_semantics<parallel>], iteration_bounds = array<i64: 2, 1>, scalar_prefetch = 0 : i64, scratch_operands = 1 : i64, tpu.core_type = #tpu.core_type<tc>, window_params = [{transform_indices = @transform_0, window_bounds = array<i64: 1, 16, 384>}, {transform_indices = @transform_1, window_bounds = array<i64: 8, 144>}, {pipeline_mode = #tpu.pipeline_mode<synchronous>, transform_indices = @transform_2, window_bounds = array<i64: 3, 256>}, {transform_indices = @transform_3, window_bounds = array<i64: 8, 1>}, {transform_indices = @transform_4, window_bounds = array<i64: 1, 8, 256>}]} {
    %c0 = arith.constant 0 : index
    %c0_0 = arith.constant 0 : index
    %0 = vector.load %arg4[%c0, %c0_0] : memref<3x256xbf16, #tpu.memory_space<vmem>>, vector<3x256xbf16>
    %c0_1 = arith.constant 0 : index
    %c0_2 = arith.constant 0 : index
    %1 = vector.load %arg3[%c0_1, %c0_2] : memref<8x144xbf16, #tpu.memory_space<vmem>>, vector<8x144xbf16>
    %c0_3 = arith.constant 0 : index
    %c0_4 = arith.constant 0 : index
    %2 = vector.load %arg5[%c0_3, %c0_4] : memref<8x1xf32, #tpu.memory_space<vmem>>, vector<8x1xf32>
    %c0_5 = arith.constant 0 : index
    %c0_6 = arith.constant 0 : index
    %c0_7 = arith.constant 0 : index
    %3 = vector.load %arg2[%c0_5, %c0_6, %c0_7] : memref<1x16x384xbf16, #tpu.memory_space<vmem>>, vector<1x16x256xbf16>
    %4 = vector.shape_cast %3 : vector<1x16x256xbf16> to vector<16x256xbf16>
    %5 = vector.extract_strided_slice %0 {offsets = [0, 0], sizes = [1, 256], strides = [1, 1]} : vector<3x256xbf16> to vector<1x256xbf16>
    %6 = vector.broadcast %5 : vector<1x256xbf16> to vector<16x256xbf16>
    %7 = arith.mulf %4, %6 : vector<16x256xbf16>
    %c0_8 = arith.constant 0 : index
    %c0_9 = arith.constant 0 : index
    %8 = vector.load %arg7[%c0_8, %c0_9] : memref<144x256xbf16, #tpu.memory_space<vmem>>, vector<16x256xbf16>
    tpu.vector_store %arg7[%c0_8, %c0_9], %7 {strides = array<i32>} : memref<144x256xbf16, #tpu.memory_space<vmem>>, vector<16x256xbf16>,
    %c0_10 = arith.constant 0 : index
    %c0_11 = arith.constant 0 : index
    %c1 = arith.constant 1 : index
    %9 = vector.load %arg2[%c0_10, %c0_11, %c1] : memref<1x16x384xbf16, #tpu.memory_space<vmem>>, vector<1x16x256xbf16>
    %10 = vector.shape_cast %9 : vector<1x16x256xbf16> to vector<16x256xbf16>
    %c16 = arith.constant 16 : index
    %c0_12 = arith.constant 0 : index
    %11 = vector.load %arg7[%c16, %c0_12] : memref<144x256xbf16, #tpu.memory_space<vmem>>, vector<16x256xbf16>
    tpu.vector_store %arg7[%c16, %c0_12], %10 {strides = array<i32>} : memref<144x256xbf16, #tpu.memory_space<vmem>>, vector<16x256xbf16>,
    %c0_13 = arith.constant 0 : index
    %c0_14 = arith.constant 0 : index
    %c2 = arith.constant 2 : index
    %12 = vector.load %arg2[%c0_13, %c0_14, %c2] : memref<1x16x384xbf16, #tpu.memory_space<vmem>>, vector<1x16x256xbf16>
    %13 = vector.shape_cast %12 : vector<1x16x256xbf16> to vector<16x256xbf16>
    %14 = vector.extract_strided_slice %0 {offsets = [2, 0], sizes = [1, 256], strides = [1, 1]} : vector<3x256xbf16> to vector<1x256xbf16>
    %15 = vector.broadcast %14 : vector<1x256xbf16> to vector<16x256xbf16>
    %16 = arith.mulf %13, %15 : vector<16x256xbf16>
    %c32 = arith.constant 32 : index
    %c0_15 = arith.constant 0 : index
    %17 = vector.load %arg7[%c32, %c0_15] : memref<144x256xbf16, #tpu.memory_space<vmem>>, vector<16x256xbf16>
    tpu.vector_store %arg7[%c32, %c0_15], %16 {strides = array<i32>} : memref<144x256xbf16, #tpu.memory_space<vmem>>, vector<16x256xbf16>,
    %c0_16 = arith.constant 0 : index
    %c0_17 = arith.constant 0 : index
    %c16_18 = arith.constant 16 : index
    %18 = vector.load %arg2[%c0_16, %c0_17, %c16_18] : memref<1x16x384xbf16, #tpu.memory_space<vmem>>, vector<1x16x256xbf16>
    %19 = vector.shape_cast %18 : vector<1x16x256xbf16> to vector<16x256xbf16>
    %20 = vector.extract_strided_slice %0 {offsets = [0, 0], sizes = [1, 256], strides = [1, 1]} : vector<3x256xbf16> to vector<1x256xbf16>
    %21 = vector.broadcast %20 : vector<1x256xbf16> to vector<16x256xbf16>
    %22 = arith.mulf %19, %21 : vector<16x256xbf16>
    %c48 = arith.constant 48 : index
    %c0_19 = arith.constant 0 : index
    %23 = vector.load %arg7[%c48, %c0_19] : memref<144x256xbf16, #tpu.memory_space<vmem>>, vector<16x256xbf16>
    tpu.vector_store %arg7[%c48, %c0_19], %22 {strides = array<i32>} : memref<144x256xbf16, #tpu.memory_space<vmem>>, vector<16x256xbf16>,
    %c0_20 = arith.constant 0 : index
    %c0_21 = arith.constant 0 : index
    %c17 = arith.constant 17 : index
    %24 = vector.load %arg2[%c0_20, %c0_21, %c17] : memref<1x16x384xbf16, #tpu.memory_space<vmem>>, vector<1x16x256xbf16>
    %25 = vector.shape_cast %24 : vector<1x16x256xbf16> to vector<16x256xbf16>
    %c64 = arith.constant 64 : index
    %c0_22 = arith.constant 0 : index
    %26 = vector.load %arg7[%c64, %c0_22] : memref<144x256xbf16, #tpu.memory_space<vmem>>, vector<16x256xbf16>
    tpu.vector_store %arg7[%c64, %c0_22], %25 {strides = array<i32>} : memref<144x256xbf16, #tpu.memory_space<vmem>>, vector<16x256xbf16>,
    %c0_23 = arith.constant 0 : index
    %c0_24 = arith.constant 0 : index
    %c18 = arith.constant 18 : index
    %27 = vector.load %arg2[%c0_23, %c0_24, %c18] : memref<1x16x384xbf16, #tpu.memory_space<vmem>>, vector<1x16x256xbf16>
    %28 = vector.shape_cast %27 : vector<1x16x256xbf16> to vector<16x256xbf16>
    %29 = vector.extract_strided_slice %0 {offsets = [2, 0], sizes = [1, 256], strides = [1, 1]} : vector<3x256xbf16> to vector<1x256xbf16>
    %30 = vector.broadcast %29 : vector<1x256xbf16> to vector<16x256xbf16>
    %31 = arith.mulf %28, %30 : vector<16x256xbf16>
    %c80 = arith.constant 80 : index
    %c0_25 = arith.constant 0 : index
    %32 = vector.load %arg7[%c80, %c0_25] : memref<144x256xbf16, #tpu.memory_space<vmem>>, vector<16x256xbf16>
    tpu.vector_store %arg7[%c80, %c0_25], %31 {strides = array<i32>} : memref<144x256xbf16, #tpu.memory_space<vmem>>, vector<16x256xbf16>,
    %c0_26 = arith.constant 0 : index
    %c0_27 = arith.constant 0 : index
    %c32_28 = arith.constant 32 : index
    %33 = vector.load %arg2[%c0_26, %c0_27, %c32_28] : memref<1x16x384xbf16, #tpu.memory_space<vmem>>, vector<1x16x256xbf16>
    %34 = vector.shape_cast %33 : vector<1x16x256xbf16> to vector<16x256xbf16>
    %35 = vector.extract_strided_slice %0 {offsets = [0, 0], sizes = [1, 256], strides = [1, 1]} : vector<3x256xbf16> to vector<1x256xbf16>
    %36 = vector.broadcast %35 : vector<1x256xbf16> to vector<16x256xbf16>
    %37 = arith.mulf %34, %36 : vector<16x256xbf16>
    %c96 = arith.constant 96 : index
    %c0_29 = arith.constant 0 : index
    %38 = vector.load %arg7[%c96, %c0_29] : memref<144x256xbf16, #tpu.memory_space<vmem>>, vector<16x256xbf16>
    tpu.vector_store %arg7[%c96, %c0_29], %37 {strides = array<i32>} : memref<144x256xbf16, #tpu.memory_space<vmem>>, vector<16x256xbf16>,
    %c0_30 = arith.constant 0 : index
    %c0_31 = arith.constant 0 : index
    %c33 = arith.constant 33 : index
    %39 = vector.load %arg2[%c0_30, %c0_31, %c33] : memref<1x16x384xbf16, #tpu.memory_space<vmem>>, vector<1x16x256xbf16>
    %40 = vector.shape_cast %39 : vector<1x16x256xbf16> to vector<16x256xbf16>
    %c112 = arith.constant 112 : index
    %c0_32 = arith.constant 0 : index
    %41 = vector.load %arg7[%c112, %c0_32] : memref<144x256xbf16, #tpu.memory_space<vmem>>, vector<16x256xbf16>
    tpu.vector_store %arg7[%c112, %c0_32], %40 {strides = array<i32>} : memref<144x256xbf16, #tpu.memory_space<vmem>>, vector<16x256xbf16>,
    %c0_33 = arith.constant 0 : index
    %c0_34 = arith.constant 0 : index
    %c34 = arith.constant 34 : index
    %42 = vector.load %arg2[%c0_33, %c0_34, %c34] : memref<1x16x384xbf16, #tpu.memory_space<vmem>>, vector<1x16x256xbf16>
    %43 = vector.shape_cast %42 : vector<1x16x256xbf16> to vector<16x256xbf16>
    %44 = vector.extract_strided_slice %0 {offsets = [2, 0], sizes = [1, 256], strides = [1, 1]} : vector<3x256xbf16> to vector<1x256xbf16>
    %45 = vector.broadcast %44 : vector<1x256xbf16> to vector<16x256xbf16>
    %46 = arith.mulf %43, %45 : vector<16x256xbf16>
    %c128 = arith.constant 128 : index
    %c0_35 = arith.constant 0 : index
    %47 = vector.load %arg7[%c128, %c0_35] : memref<144x256xbf16, #tpu.memory_space<vmem>>, vector<16x256xbf16>
    tpu.vector_store %arg7[%c128, %c0_35], %46 {strides = array<i32>} : memref<144x256xbf16, #tpu.memory_space<vmem>>, vector<16x256xbf16>,
    %c0_36 = arith.constant 0 : index
    %c0_37 = arith.constant 0 : index
    %48 = vector.load %arg7[%c0_36, %c0_37] : memref<144x256xbf16, #tpu.memory_space<vmem>>, vector<144x256xbf16>
    %cst = arith.constant dense<0.000000e+00> : vector<8x256xf32>
    %49 = tpu.matmul %1, %48, %cst {dimension_numbers = #tpu.dot_dimension_numbers<[1], [0], [0], [1], [0, 0, 1, 1], [], []>} : vector<8x144xbf16>, vector<144x256xbf16>, vector<8x256xf32> -> vector<8x256xf32>
    %50 = vector.broadcast %2 : vector<8x1xf32> to vector<8x256xf32>
    %51 = arith.addf %49, %50 : vector<8x256xf32>
    %cst_38 = arith.constant 0.000000e+00 : f32
    %52 = vector.broadcast %cst_38 : f32 to vector<8x256xf32>
    %53 = arith.maximumf %51, %52 : vector<8x256xf32>
    %c0_39 = arith.constant 0 : index
    %c0_40 = arith.constant 0 : index
    %c0_41 = arith.constant 0 : index
    %54 = vector.load %arg6[%c0_39, %c0_40, %c0_41] : memref<1x8x256xf32, #tpu.memory_space<vmem>>, vector<1x8x256xf32>
    %55 = vector.shape_cast %54 : vector<1x8x256xf32> to vector<8x256xf32>
    %56 = vector.shape_cast %53 : vector<8x256xf32> to vector<1x8x256xf32>
    tpu.vector_store %arg6[%c0_39, %c0_40, %c0_41], %56 {strides = array<i32>} : memref<1x8x256xf32, #tpu.memory_space<vmem>>, vector<1x8x256xf32>,
    return
  }
  func.func @transform_0(%arg0: i32, %arg1: i32) -> (i32, i32, i32) {
    %c0_i32 = arith.constant 0 : i32
    %c0_i32_0 = arith.constant 0 : i32
    %c0_i32_1 = arith.constant 0 : i32
    return %arg0, %c0_i32, %c0_i32_0 : i32, i32, i32
  }
  func.func @transform_1(%arg0: i32, %arg1: i32) -> (i32, i32) {
    %c0_i32 = arith.constant 0 : i32
    %c0_i32_0 = arith.constant 0 : i32
    return %arg1, %c0_i32 : i32, i32
  }
  func.func @transform_2(%arg0: i32, %arg1: i32) -> (i32, i32) {
    %c0_i32 = arith.constant 0 : i32
    %c0_i32_0 = arith.constant 0 : i32
    %c0_i32_1 = arith.constant 0 : i32
    return %c0_i32, %c0_i32_0 : i32, i32
  }
  func.func @transform_3(%arg0: i32, %arg1: i32) -> (i32, i32) {
    %c0_i32 = arith.constant 0 : i32
    %c0_i32_0 = arith.constant 0 : i32
    return %arg1, %c0_i32 : i32, i32
  }
  func.func @transform_4(%arg0: i32, %arg1: i32) -> (i32, i32, i32) {
    %c0_i32 = arith.constant 0 : i32
    %c0_i32_0 = arith.constant 0 : i32
    return %arg0, %arg1, %c0_i32 : i32, i32, i32
  }
}

</mosaic_0001>

<llo_original>
// kernel: conv_block_forward.1
$region0: #{conv_block_forward.1}
  #allocation0 [shape = 'u32[]', space=smem, size = 0x4, offset = 0x4, fixed_abs, tag = 'smem constant byte address 0x4 - core index']
  #allocation1 [shape = 'u32[72,128]{1,0:T(1,128)}', space=vmem, size = 0x9000, scoped, tag = 'internal scratch']
  #allocation2 [shape = 'bf16[144,256]{1,0:T(8,128)(2,1)}', space=vmem, size = 0x12000, scoped, tag = 'scratch operand']
  %s0 = inlined_call_operand.vmem [shape: bf16[2,16,384], index: 0, kind: input, shape index: {}]
  %s1 = inlined_call_operand.vmem [shape: bf16[8,144], index: 1, kind: input, shape index: {}]
  %s2 = inlined_call_operand.vmem [shape: bf16[3,256], index: 2, kind: input, shape index: {}]
  %s3 = inlined_call_operand.vmem [shape: f32[8,1], index: 3, kind: input, shape index: {}]
  %s4 = inlined_call_operand.vmem [shape: f32[2,8,256], index: 4, kind: output, shape index: {}]
  %s5 = sld [smem:[#allocation0]]
  $region49: #{conv_block_forward.1} parent=0
    _
  %s7 = ssub.s32 1, %s5
  %s8 = scalar_select 0, %s7, %s5
  loop: start=0, step=1, limit=4
  $region2: #{conv_block_forward.1} parent=0 // loop_pre_header
    _
  $region3: #{conv_block_forward.1} parent=0 // loop_header
    %s10 = sphi 0, %s14
    %p11 = scmp.ge.s32.totalorder %s10, 4
    %s17 = sphi 0, %s29
    %s18 = sphi 0, %s25
    %s19 = sphi 0, %s17
    %s20 = sphi 0, %s18
    %s21 = sphi 0, %s19
    %s22 = sphi 0, %s20
    %s32 = sphi 0, %s34
    %s35 = sphi 0, %s32
    %s36 = sphi 0, %s35
    %s52 = sphi 0, %s36
    %s58 = sphi 0, %s60
    %s61 = sphi 0, %s58
    %s62 = sphi 0, %s61
    %s78 = sphi 0, %s62
    %s82 = sphi 0, %s82
    %s84 = sphi 0, %s82
    %s85 = sphi 0, %s84
    %s99 = sphi 0, %s85
    %s105 = sphi 0, %s107
    %s108 = sphi 0, %s105
    %s109 = sphi 0, %s108
    %s125 = sphi 0, %s109
    %s133 = sphi 0, %s135
    %s136 = sphi 0, %s133
    %s137 = sphi 0, %s136
    %s153 = sphi 0, %s137
  $region4: #{conv_block_forward.1} parent=0 // loop_header_branch
    %13 = sbr.rel (%p11) target = $region8
  $region5: #{conv_block_forward.1} parent=0 // loop_body
    %s15 = ssub.s32 %s10, 1
    %s16 = ssub.s32 %s10, 2
    %s23 = sadd.s32 1, %s18
    %p24 = scmp.ge.s32.totalorder %s23, 1
    %s25 = scalar_select %p24, 0, %s23
    %s26 = sadd.s32 1, %s17
    %s27 = scalar_select %p24, %s26, %s17
    %p28 = scmp.ge.s32.totalorder %s27, 2
    %s29 = scalar_select %p28, 0, %s27
    %s30 = ssub.s32 %s17, %s29
    %p31 = scmp.eq.s32.totalorder %s30, 0
    %s33 = sadd.s32 %s32, 1
    %s34 = scalar_select %p31, %s32, %s33
    %p37 = pneg %p31
    %p38 = scmp.eq.s32.totalorder %s10, 1
    %p39 = por %p37, %p38
    %p40 = scmp.ne.s32.totalorder %s32, %s35
    %p41 = scmp.eq.s32.totalorder %s10, 0
    %p42 = por %p40, %p41
    %p43 = scmp.ne.s32.totalorder %s32, %s35
    %p44 = scmp.eq.s32.totalorder %s15, 1
    %p45 = por %p43, %p44
    %p46 = scmp.ne.s32.totalorder %s35, %s36
    %p47 = scmp.eq.s32.totalorder %s15, 0
    %p48 = por %p46, %p47
    %p49 = scmp.ne.s32.totalorder %s35, %s36
    %p50 = scmp.eq.s32.totalorder %s16, 1
    %p51 = por %p49, %p50
    %p53 = scmp.ne.s32.totalorder %s36, %s52
    %p54 = scmp.eq.s32.totalorder %s16, 0
    %p55 = por %p53, %p54
    %s56 = ssub.s32 %s18, %s25
    %p57 = scmp.eq.s32.totalorder %s56, 0
    %s59 = sadd.s32 %s58, 1
    %s60 = scalar_select %p57, %s58, %s59
    %p63 = pneg %p57
    %p64 = scmp.eq.s32.totalorder %s10, 1
    %p65 = por %p63, %p64
    %p66 = scmp.ne.s32.totalorder %s58, %s61
    %p67 = scmp.eq.s32.totalorder %s10, 0
    %p68 = por %p66, %p67
    %p69 = scmp.ne.s32.totalorder %s58, %s61
    %p70 = scmp.eq.s32.totalorder %s15, 1
    %p71 = por %p69, %p70
    %p72 = scmp.ne.s32.totalorder %s61, %s62
    %p73 = scmp.eq.s32.totalorder %s15, 0
    %p74 = por %p72, %p73
    %p75 = scmp.ne.s32.totalorder %s61, %s62
    %p76 = scmp.eq.s32.totalorder %s16, 1
    %p77 = por %p75, %p76
    %p79 = scmp.ne.s32.totalorder %s62, %s78
    %p80 = scmp.eq.s32.totalorder %s16, 0
    %p81 = por %p79, %p80
    %s83 = sadd.s32 %s82, 1
    %p86 = scmp.eq.s32.totalorder %s10, 1
    %p87 = scmp.ne.s32.totalorder %s82, %s84
    %p88 = scmp.eq.s32.totalorder %s10, 0
    %p89 = por %p87, %p88
    %p90 = scmp.ne.s32.totalorder %s82, %s84
    %p91 = scmp.eq.s32.totalorder %s15, 1
    %p92 = por %p90, %p91
    %p93 = scmp.ne.s32.totalorder %s84, %s85
    %p94 = scmp.eq.s32.totalorder %s15, 0
    %p95 = por %p93, %p94
    %p96 = scmp.ne.s32.totalorder %s84, %s85
    %p97 = scmp.eq.s32.totalorder %s16, 1
    %p98 = por %p96, %p97
    %p100 = scmp.ne.s32.totalorder %s85, %s99
    %p101 = scmp.eq.s32.totalorder %s16, 0
    %p102 = por %p100, %p101
    %s103 = ssub.s32 %s18, %s25
    %p104 = scmp.eq.s32.totalorder %s103, 0
    %s106 = sadd.s32 %s105, 1
    %s107 = scalar_select %p104, %s105, %s106
    %p110 = pneg %p104
    %p111 = scmp.eq.s32.totalorder %s10, 1
    %p112 = por %p110, %p111
    %p113 = scmp.ne.s32.totalorder %s105, %s108
    %p114 = scmp.eq.s32.totalorder %s10, 0
    %p115 = por %p113, %p114
    %p116 = scmp.ne.s32.totalorder %s105, %s108
    %p117 = scmp.eq.s32.totalorder %s15, 1
    %p118 = por %p116, %p117
    %p119 = scmp.ne.s32.totalorder %s108, %s109
    %p120 = scmp.eq.s32.totalorder %s15, 0
    %p121 = por %p119, %p120
    %p122 = scmp.ne.s32.totalorder %s108, %s109
    %p123 = scmp.eq.s32.totalorder %s16, 1
    %p124 = por %p122, %p123
    %p126 = scmp.ne.s32.totalorder %s109, %s125
    %p127 = scmp.eq.s32.totalorder %s16, 0
    %p128 = por %p126, %p127
    %s129 = ssub.s32 %s17, %s29
    %s130 = ssub.s32 %s18, %s25
    %s131 = sor.u32 %s129, %s130
    %p132 = scmp.eq.s32.totalorder %s131, 0
    %s134 = sadd.s32 %s133, 1
    %s135 = scalar_select %p132, %s133, %s134
    %p138 = pneg %p132
    %p139 = scmp.eq.s32.totalorder %s10, 1
    %p140 = por %p138, %p139
    %p141 = scmp.ne.s32.totalorder %s133, %s136
    %p142 = scmp.eq.s32.totalorder %s10, 0
    %p143 = por %p141, %p142
    %p144 = scmp.ne.s32.totalorder %s133, %s136
    %p145 = scmp.eq.s32.totalorder %s15, 1
    %p146 = por %p144, %p145
    %p147 = scmp.ne.s32.totalorder %s136, %s137
    %p148 = scmp.eq.s32.totalorder %s15, 0
    %p149 = por %p147, %p148
    %p150 = scmp.ne.s32.totalorder %s136, %s137
    %p151 = scmp.eq.s32.totalorder %s16, 1
    %p152 = por %p150, %p151
    %p154 = scmp.ne.s32.totalorder %s137, %s153
    %p155 = scmp.eq.s32.totalorder %s16, 0
    %p156 = por %p154, %p155
    %p157 = scmp.le.s32.totalorder 1, %s10
    %p158 = scmp.lt.s32.totalorder %s10, 3
    %p159 = pnand %p157, %p158
    %p160 = pneg %p159
    // Predicated region
    $region9: #{conv_block_forward.1} parent=5 // pred_check
      _
    $region10: #{conv_block_forward.1} parent=5 // pred_check_branch
      %162 = sbr.rel (%p159) target = $region12
    $region11: #{conv_block_forward.1} parent=5 // pred_region
      %s163 = ssub.s32 %s10, 1
      // Predicated region
      $region13: #{conv_block_forward.1} parent=11 // pred_check
        %p164 = pneg %p74
      $region14: #{conv_block_forward.1} parent=11 // pred_check_branch
        %166 = sbr.rel (%p164) target = $region16
      $region15: #{conv_block_forward.1} parent=11 // pred_region
        %p167 = scmp.lt.s32.totalorder %s20, 0
        %s168 = scalar_select %p167, %s20, 0
        %s169 = smul.addr %s168, 2
        %s170 = smul.addr %s169, 4
        %s171 = scalar_lea.vmem %s1, %s170
      $region16: #{conv_block_forward.1} parent=11 // pred_fallthru
        _
      // Predicated region
      $region17: #{conv_block_forward.1} parent=11 // pred_check
        %p172 = pneg %p95
      $region18: #{conv_block_forward.1} parent=11 // pred_check_branch
        %174 = sbr.rel (%p172) target = $region20
      $region19: #{conv_block_forward.1} parent=11 // pred_region
        _
      $region20: #{conv_block_forward.1} parent=11 // pred_fallthru
        _
      // Predicated region
      $region21: #{conv_block_forward.1} parent=11 // pred_check
        %p175 = pneg %p121
      $region22: #{conv_block_forward.1} parent=11 // pred_check_branch
        %177 = sbr.rel (%p175) target = $region24
      $region23: #{conv_block_forward.1} parent=11 // pred_region
        %p178 = scmp.lt.s32.totalorder %s20, 0
        %s179 = scalar_select %p178, %s20, 0
        %s180 = smul.addr %s179, 8
        %s181 = scalar_lea.vmem %s3, %s180
      $region24: #{conv_block_forward.1} parent=11 // pred_fallthru
        _
    $region12: #{conv_block_forward.1} parent=5 // pred_fallthru
      _
    %p182 = scmp.lt.s32.totalorder %s10, 2
    // Predicated region
    $region25: #{conv_block_forward.1} parent=5 // pred_check
      %p183 = pneg %p182
    $region26: #{conv_block_forward.1} parent=5 // pred_check_branch
      %185 = sbr.rel (%p183) target = $region28
    $region27: #{conv_block_forward.1} parent=5 // pred_region
      // Predicated region
      $region29: #{conv_block_forward.1} parent=27 // pred_check
        %p186 = pneg %p42
      $region30: #{conv_block_forward.1} parent=27 // pred_check_branch
        %188 = sbr.rel (%p186) target = $region32
      $region31: #{conv_block_forward.1} parent=27 // pred_region
        %p189 = scmp.lt.s32.totalorder %s17, 1
        %s190 = scalar_select %p189, %s17, 1
        %s191 = smul.addr %s190, 6
        %s192 = smul.addr %s191, 4
        %s193 = scalar_lea.vmem %s0, %s192
      $region32: #{conv_block_forward.1} parent=27 // pred_fallthru
        _
    $region28: #{conv_block_forward.1} parent=5 // pred_fallthru
      _
    %p194 = scmp.le.s32.totalorder 1, %s10
    %p195 = scmp.lt.s32.totalorder %s10, 3
    %p196 = pnand %p194, %p195
    %p197 = pneg %p196
    // Predicated region
    $region33: #{conv_block_forward.1} parent=5 // pred_check
      _
    $region34: #{conv_block_forward.1} parent=5 // pred_check_branch
      %199 = sbr.rel (%p196) target = $region36
    $region35: #{conv_block_forward.1} parent=5 // pred_region
      %s200 = ssub.s32 %s10, 1
      %p201 = scmp.lt.s32.totalorder %s19, 1
      %s202 = scalar_select %p201, %s19, 1
      %s203 = smul.addr %s202, 6
      %s204 = smul.addr %s203, 4
      %s205 = scalar_lea.vmem %s0, %s204
      %p206 = pneg %p48
      %p207 = pneg %p45
      %p208 = scmp.lt.s32.totalorder %s20, 0
      %s209 = scalar_select %p208, %s20, 0
      %s210 = smul.addr %s209, 2
      %s211 = smul.addr %s210, 4
      %s212 = scalar_lea.vmem %s1, %s211
      %p213 = pneg %p74
      %p214 = pneg %p71
      %p215 = pneg %p95
      %p216 = pneg %p92
      %p217 = scmp.lt.s32.totalorder %s20, 0
      %s218 = scalar_select %p217, %s20, 0
      %s219 = smul.addr %s218, 8
      %s220 = scalar_lea.vmem %s3, %s219
      %p221 = pneg %p121
      %p222 = pneg %p118
      %p223 = pneg %p149
      %p224 = pneg %p146
      %p225 = scmp.lt.s32.totalorder %s19, 1
      %s226 = scalar_select %p225, %s19, 1
      %p227 = scmp.lt.s32.totalorder %s20, 0
      %s228 = scalar_select %p227, %s20, 0
      %s229 = smul.addr %s228, 2
      %s230 = smul.addr %s226, 2
      %s231 = sadd.s32 %s229, %s230
      %s232 = smul.addr %s231, 8
      %s233 = scalar_lea.vmem %s4, %s232
      %p234 = scmp.lt.s32.totalorder %s19, 1
      %s235 = scalar_select %p234, %s19, 1
      %s236 = smul.addr %s235, 6
      %s237 = smul.addr %s236, 4
      %s238 = scalar_lea.vmem %s0, %s237
      %p239 = scmp.lt.s32.totalorder %s20, 0
      %s240 = scalar_select %p239, %s20, 0
      %s241 = smul.addr %s240, 2
      %s242 = smul.addr %s241, 4
      %s243 = scalar_lea.vmem %s1, %s242
      %p244 = scmp.lt.s32.totalorder %s20, 0
      %s245 = scalar_select %p244, %s20, 0
      %s246 = smul.addr %s245, 8
      %s247 = scalar_lea.vmem %s3, %s246
      %p248 = scmp.lt.s32.totalorder %s19, 1
      %s249 = scalar_select %p248, %s19, 1
      %p250 = scmp.lt.s32.totalorder %s20, 0
      %s251 = scalar_select %p250, %s20, 0
      %s252 = smul.addr %s251, 2
      %s253 = smul.addr %s249, 2
      %s254 = sadd.s32 %s252, %s253
      %s255 = smul.addr %s254, 8
      %s256 = scalar_lea.vmem %s4, %s255
      %v258 = vld [vmem:[%s2] sm:$0xf]
      %v259 = vld [vmem:[%s243] sm:$0xff]
      %v260 = vld [vmem:[%s247] sm:$0xff]
      %v261 = vld [vmem:[%s238] sm:$0xff]
      %v262 = vld [vmem:[%s238 + $0xc] sm:$0xff]
      %264 = vst [vmem:[#allocation1] ss:$4 sm:$0xff] %v258
      %v265 = vld.sshfl [vmem:[#allocation1] sm:$0xff pattern:$0x73625140]
      %v266 = vld.sshfl [vmem:[#allocation1 + $0x8] sm:$0xff pattern:$0x73625140]
      %v267 = vpack.i.b16 %v265, %v265
      %v269 = vperm.slane %v267, 0
      %v270 = vpack.i.b16 %v266, %v266
      %v272 = vperm.slane %v270, 0
      %v273 = vunpack.c.l.bf16 %v261
      %v274 = vunpack.c.h.bf16 %v261
      %v275 = vunpack.c.l.bf16 %v262
      %v276 = vunpack.c.h.bf16 %v262
      %v277 = vunpack.c.l.bf16 %v269
      %v278 = vunpack.c.l.bf16 %v272
      %v279 = vmul.f32 %v273, %v277
      %v280 = vmul.f32 %v274, %v278
      %v281 = vmul.f32 %v275, %v277
      %v282 = vmul.f32 %v276, %v278
      %v283 = vpack.c.bf16 %v280, %v279
      %v284 = vpack.c.bf16 %v282, %v281
      %285 = vst [vmem:[#allocation2] sm:$0xff] %v283
      %286 = vst [vmem:[#allocation2 + $0x8] sm:$0xff] %v284
      %v287 = vld [vmem:[%s238] sm:$0xff]
      %v288 = vld [vmem:[%s238 + $0x8] sm:$0xf]
      %v289 = vld [vmem:[%s238 + $0xc] sm:$0xff]
      %v290 = vld [vmem:[%s238 + $0x14] sm:$0xf]
      %295 = vrot.lane.b32.xlu0 %v287, 127
      %v296 = vpop.permute.xlu0 %295
      %297 = vrot.lane.b32.xlu0 %v288, 127
      %v298 = vpop.permute.xlu0 %297
      %299 = vrot.lane.b32.xlu0 %v289, 127
      %v300 = vpop.permute.xlu0 %299
      %301 = vrot.lane.b32.xlu0 %v290, 127
      %v302 = vpop.permute.xlu0 %301
      %v303 = vrot.slane %v296, 4
      %v304 = vrot.slane %v298, 4
      %v305 = vrot.slane %v300, 4
      %v306 = vrot.slane %v302, 4
      %vm307 = vcmask 1043456
      %v308 = vsel %vm307, %v303, %v304
      %vm309 = vcmask 1039360
      %v310 = vsel %vm309, %v296, %v308
      %v311 = vsel %vm307, %v305, %v306
      %v312 = vsel %vm309, %v300, %v311
      %315 = vst [vmem:[#allocation2 + $0x10] sm:$0xff] %v310
      %316 = vst [vmem:[#allocation2 + $0x18] sm:$0xff] %v312
      %v317 = vld [vmem:[%s238] sm:$0xff]
      %v318 = vld [vmem:[%s238 + $0x8] sm:$0xf]
      %v319 = vld [vmem:[%s238 + $0xc] sm:$0xff]
      %v320 = vld [vmem:[%s238 + $0x14] sm:$0xf]
      %321 = vst [vmem:[#allocation1] ss:$4 sm:$0xff] %v258
      %v322 = vld.sshfl [vmem:[#allocation1] sm:$0xff pattern:$0x73625140]
      %v323 = vld.sshfl [vmem:[#allocation1 + $0x8] sm:$0xff pattern:$0x73625140]
      %v324 = vpack.i.b16 %v322, %v322
      %v326 = vperm.slane %v324, 1
      %v327 = vpack.i.b16 %v323, %v323
      %v329 = vperm.slane %v327, 1
      %v330 = vunpack.c.l.bf16 %v317
      %v331 = vunpack.c.h.bf16 %v317
      %v332 = vunpack.c.l.bf16 %v318
      %v333 = vunpack.c.l.bf16 %v319
      %v334 = vunpack.c.h.bf16 %v319
      %v335 = vunpack.c.l.bf16 %v320
      %v336 = vunpack.c.l.bf16 %v326
      %v337 = vunpack.c.l.bf16 %v329
      %340 = vrot.lane.b32.xlu0 %v336, 2
      %v341 = vpop.permute.xlu0 %340
      %342 = vrot.lane.b32.xlu0 %v337, 2
      %v343 = vpop.permute.xlu0 %342
      %vm344 = vcmask 15360
      %v345 = vsel %vm344, %v341, %v343
      %v349 = vmul.f32 %v330, %v341
      %v350 = vmul.f32 %v331, %v345
      %v351 = vmul.f32 %v332, %v343
      %v352 = vmul.f32 %v333, %v341
      %v353 = vmul.f32 %v334, %v345
      %v354 = vmul.f32 %v335, %v343
      %v355 = vpack.c.bf16 %v350, %v349
      %v356 = vpack.c.bf16 %v351, %v351
      %v357 = vpack.c.bf16 %v353, %v352
      %v358 = vpack.c.bf16 %v354, %v354
      %363 = vrot.lane.b32.xlu0 %v355, 126
      %v364 = vpop.permute.xlu0 %363
      %365 = vrot.lane.b32.xlu0 %v356, 126
      %v366 = vpop.permute.xlu0 %365
      %367 = vrot.lane.b32.xlu0 %v357, 126
      %v368 = vpop.permute.xlu0 %367
      %369 = vrot.lane.b32.xlu0 %v358, 126
      %v370 = vpop.permute.xlu0 %369
      %v371 = vrot.slane %v364, 4
      %v372 = vrot.slane %v366, 4
      %v373 = vrot.slane %v368, 4
      %v374 = vrot.slane %v370, 4
      %v375 = vsel %vm307, %v371, %v372
      %vm376 = vcmask 1031168
      %v377 = vsel %vm376, %v364, %v375
      %v378 = vsel %vm307, %v373, %v374
      %v379 = vsel %vm376, %v368, %v378
      %382 = vst [vmem:[#allocation2 + $0x20] sm:$0xff] %v377
      %383 = vst [vmem:[#allocation2 + $0x28] sm:$0xff] %v379
      %v384 = vld [vmem:[%s238] sm:$0xff]
      %v385 = vld [vmem:[%s238 + $0x8] sm:$0xf]
      %v386 = vld [vmem:[%s238 + $0xc] sm:$0xff]
      %v387 = vld [vmem:[%s238 + $0x14] sm:$0xf]
      %v388 = vunpack.c.l.bf16 %v384
      %v389 = vunpack.c.h.bf16 %v384
      %v390 = vunpack.c.l.bf16 %v385
      %v391 = vunpack.c.l.bf16 %v386
      %v392 = vunpack.c.h.bf16 %v386
      %v393 = vunpack.c.l.bf16 %v387
      %396 = vrot.lane.b32.xlu0 %v277, 16
      %v397 = vpop.permute.xlu0 %396
      %398 = vrot.lane.b32.xlu0 %v278, 16
      %v399 = vpop.permute.xlu0 %398
      %vm400 = vcmask 130048
      %v401 = vsel %vm400, %v397, %v399
      %v405 = vmul.f32 %v388, %v397
      %v406 = vmul.f32 %v389, %v401
      %v407 = vmul.f32 %v390, %v399
      %v408 = vmul.f32 %v391, %v397
      %v409 = vmul.f32 %v392, %v401
      %v410 = vmul.f32 %v393, %v399
      %v411 = vpack.c.bf16 %v406, %v405
      %v412 = vpack.c.bf16 %v407, %v407
      %v413 = vpack.c.bf16 %v409, %v408
      %v414 = vpack.c.bf16 %v410, %v410
      %419 = vrot.lane.b32.xlu0 %v411, 112
      %v420 = vpop.permute.xlu0 %419
      %421 = vrot.lane.b32.xlu0 %v412, 112
      %v422 = vpop.permute.xlu0 %421
      %423 = vrot.lane.b32.xlu0 %v413, 112
      %v424 = vpop.permute.xlu0 %423
      %425 = vrot.lane.b32.xlu0 %v414, 112
      %v426 = vpop.permute.xlu0 %425
      %v427 = vrot.slane %v420, 4
      %v428 = vrot.slane %v422, 4
      %v429 = vrot.slane %v424, 4
      %v430 = vrot.slane %v426, 4
      %v431 = vsel %vm307, %v427, %v428
      %vm432 = vcmask 916480
      %v433 = vsel %vm432, %v420, %v431
      %v434 = vsel %vm307, %v429, %v430
      %v435 = vsel %vm432, %v424, %v434
      %438 = vst [vmem:[#allocation2 + $0x30] sm:$0xff] %v433
      %439 = vst [vmem:[#allocation2 + $0x38] sm:$0xff] %v435
      %v440 = vld [vmem:[%s238] sm:$0xff]
      %v441 = vld [vmem:[%s238 + $0x8] sm:$0xf]
      %v442 = vld [vmem:[%s238 + $0xc] sm:$0xff]
      %v443 = vld [vmem:[%s238 + $0x14] sm:$0xf]
      %448 = vrot.lane.b32.xlu0 %v440, 111
      %v449 = vpop.permute.xlu0 %448
      %450 = vrot.lane.b32.xlu0 %v441, 111
      %v451 = vpop.permute.xlu0 %450
      %452 = vrot.lane.b32.xlu0 %v442, 111
      %v453 = vpop.permute.xlu0 %452
      %454 = vrot.lane.b32.xlu0 %v443, 111
      %v455 = vpop.permute.xlu0 %454
      %v456 = vrot.slane %v449, 4
      %v457 = vrot.slane %v451, 4
      %v458 = vrot.slane %v453, 4
      %v459 = vrot.slane %v455, 4
      %v460 = vsel %vm307, %v456, %v457
      %vm461 = vcmask 908288
      %v462 = vsel %vm461, %v449, %v460
      %v463 = vsel %vm307, %v458, %v459
      %v464 = vsel %vm461, %v453, %v463
      %467 = vst [vmem:[#allocation2 + $0x40] sm:$0xff] %v462
      %468 = vst [vmem:[#allocation2 + $0x48] sm:$0xff] %v464
      %v469 = vld [vmem:[%s238] sm:$0xff]
      %v470 = vld [vmem:[%s238 + $0x8] sm:$0xf]
      %v471 = vld [vmem:[%s238 + $0xc] sm:$0xff]
      %v472 = vld [vmem:[%s238 + $0x14] sm:$0xf]
      %v473 = vunpack.c.l.bf16 %v469
      %v474 = vunpack.c.h.bf16 %v469
      %v475 = vunpack.c.l.bf16 %v470
      %v476 = vunpack.c.l.bf16 %v471
      %v477 = vunpack.c.h.bf16 %v471
      %v478 = vunpack.c.l.bf16 %v472
      %479 = vrot.lane.b32.xlu0 %v336, 18
      %v480 = vpop.permute.xlu0 %479
      %481 = vrot.lane.b32.xlu0 %v337, 18
      %v482 = vpop.permute.xlu0 %481
      %vm483 = vcmask 146432
      %v484 = vsel %vm483, %v480, %v482
      %v488 = vmul.f32 %v473, %v480
      %v489 = vmul.f32 %v474, %v484
      %v490 = vmul.f32 %v475, %v482
      %v491 = vmul.f32 %v476, %v480
      %v492 = vmul.f32 %v477, %v484
      %v493 = vmul.f32 %v478, %v482
      %v494 = vpack.c.bf16 %v489, %v488
      %v495 = vpack.c.bf16 %v490, %v490
      %v496 = vpack.c.bf16 %v492, %v491
      %v497 = vpack.c.bf16 %v493, %v493
      %502 = vrot.lane.b32.xlu0 %v494, 110
      %v503 = vpop.permute.xlu0 %502
      %504 = vrot.lane.b32.xlu0 %v495, 110
      %v505 = vpop.permute.xlu0 %504
      %506 = vrot.lane.b32.xlu0 %v496, 110
      %v507 = vpop.permute.xlu0 %506
      %508 = vrot.lane.b32.xlu0 %v497, 110
      %v509 = vpop.permute.xlu0 %508
      %v510 = vrot.slane %v503, 4
      %v511 = vrot.slane %v505, 4
      %v512 = vrot.slane %v507, 4
      %v513 = vrot.slane %v509, 4
      %v514 = vsel %vm307, %v510, %v511
      %vm515 = vcmask 900096
      %v516 = vsel %vm515, %v503, %v514
      %v517 = vsel %vm307, %v512, %v513
      %v518 = vsel %vm515, %v507, %v517
      %521 = vst [vmem:[#allocation2 + $0x50] sm:$0xff] %v516
      %522 = vst [vmem:[#allocation2 + $0x58] sm:$0xff] %v518
      %v523 = vld [vmem:[%s238] sm:$0xff]
      %v524 = vld [vmem:[%s238 + $0x8] sm:$0xf]
      %v525 = vld [vmem:[%s238 + $0xc] sm:$0xff]
      %v526 = vld [vmem:[%s238 + $0x14] sm:$0xf]
      %v527 = vunpack.c.l.bf16 %v523
      %v528 = vunpack.c.h.bf16 %v523
      %v529 = vunpack.c.l.bf16 %v524
      %v530 = vunpack.c.l.bf16 %v525
      %v531 = vunpack.c.h.bf16 %v525
      %v532 = vunpack.c.l.bf16 %v526
      %533 = vrot.lane.b32.xlu0 %v277, 32
      %v534 = vpop.permute.xlu0 %533
      %535 = vrot.lane.b32.xlu0 %v278, 32
      %v536 = vpop.permute.xlu0 %535
      %vm537 = vcmask 261120
      %v538 = vsel %vm537, %v534, %v536
      %v542 = vmul.f32 %v527, %v534
      %v543 = vmul.f32 %v528, %v538
      %v544 = vmul.f32 %v529, %v536
      %v545 = vmul.f32 %v530, %v534
      %v546 = vmul.f32 %v531, %v538
      %v547 = vmul.f32 %v532, %v536
      %v548 = vpack.c.bf16 %v543, %v542
      %v549 = vpack.c.bf16 %v544, %v544
      %v550 = vpack.c.bf16 %v546, %v545
      %v551 = vpack.c.bf16 %v547, %v547
      %556 = vrot.lane.b32.xlu0 %v548, 96
      %v557 = vpop.permute.xlu0 %556
      %558 = vrot.lane.b32.xlu0 %v549, 96
      %v559 = vpop.permute.xlu0 %558
      %560 = vrot.lane.b32.xlu0 %v550, 96
      %v561 = vpop.permute.xlu0 %560
      %562 = vrot.lane.b32.xlu0 %v551, 96
      %v563 = vpop.permute.xlu0 %562
      %v564 = vrot.slane %v557, 4
      %v565 = vrot.slane %v559, 4
      %v566 = vrot.slane %v561, 4
      %v567 = vrot.slane %v563, 4
      %v568 = vsel %vm307, %v564, %v565
      %vm569 = vcmask 785408
      %v570 = vsel %vm569, %v557, %v568
      %v571 = vsel %vm307, %v566, %v567
      %v572 = vsel %vm569, %v561, %v571
      %575 = vst [vmem:[#allocation2 + $0x60] sm:$0xff] %v570
      %576 = vst [vmem:[#allocation2 + $0x68] sm:$0xff] %v572
      %v577 = vld [vmem:[%s238] sm:$0xff]
      %v578 = vld [vmem:[%s238 + $0x8] sm:$0xf]
      %v579 = vld [vmem:[%s238 + $0xc] sm:$0xff]
      %v580 = vld [vmem:[%s238 + $0x14] sm:$0xf]
      %585 = vrot.lane.b32.xlu0 %v577, 95
      %v586 = vpop.permute.xlu0 %585
      %587 = vrot.lane.b32.xlu0 %v578, 95
      %v588 = vpop.permute.xlu0 %587
      %589 = vrot.lane.b32.xlu0 %v579, 95
      %v590 = vpop.permute.xlu0 %589
      %591 = vrot.lane.b32.xlu0 %v580, 95
      %v592 = vpop.permute.xlu0 %591
      %v593 = vrot.slane %v586, 4
      %v594 = vrot.slane %v588, 4
      %v595 = vrot.slane %v590, 4
      %v596 = vrot.slane %v592, 4
      %v597 = vsel %vm307, %v593, %v594
      %vm598 = vcmask 777216
      %v599 = vsel %vm598, %v586, %v597
      %v600 = vsel %vm307, %v595, %v596
      %v601 = vsel %vm598, %v590, %v600
      %604 = vst [vmem:[#allocation2 + $0x70] sm:$0xff] %v599
      %605 = vst [vmem:[#allocation2 + $0x78] sm:$0xff] %v601
      %v606 = vld [vmem:[%s238] sm:$0xff]
      %v607 = vld [vmem:[%s238 + $0x8] sm:$0xf]
      %v608 = vld [vmem:[%s238 + $0xc] sm:$0xff]
      %v609 = vld [vmem:[%s238 + $0x14] sm:$0xf]
      %v610 = vunpack.c.l.bf16 %v606
      %v611 = vunpack.c.h.bf16 %v606
      %v612 = vunpack.c.l.bf16 %v607
      %v613 = vunpack.c.l.bf16 %v608
      %v614 = vunpack.c.h.bf16 %v608
      %v615 = vunpack.c.l.bf16 %v609
      %616 = vrot.lane.b32.xlu0 %v336, 34
      %v617 = vpop.permute.xlu0 %616
      %618 = vrot.lane.b32.xlu0 %v337, 34
      %v619 = vpop.permute.xlu0 %618
      %vm620 = vcmask 277504
      %v621 = vsel %vm620, %v617, %v619
      %v625 = vmul.f32 %v610, %v617
      %v626 = vmul.f32 %v611, %v621
      %v627 = vmul.f32 %v612, %v619
      %v628 = vmul.f32 %v613, %v617
      %v629 = vmul.f32 %v614, %v621
      %v630 = vmul.f32 %v615, %v619
      %v631 = vpack.c.bf16 %v626, %v625
      %v632 = vpack.c.bf16 %v627, %v627
      %v633 = vpack.c.bf16 %v629, %v628
      %v634 = vpack.c.bf16 %v630, %v630
      %639 = vrot.lane.b32.xlu0 %v631, 94
      %v640 = vpop.permute.xlu0 %639
      %641 = vrot.lane.b32.xlu0 %v632, 94
      %v642 = vpop.permute.xlu0 %641
      %643 = vrot.lane.b32.xlu0 %v633, 94
      %v644 = vpop.permute.xlu0 %643
      %645 = vrot.lane.b32.xlu0 %v634, 94
      %v646 = vpop.permute.xlu0 %645
      %v647 = vrot.slane %v640, 4
      %v648 = vrot.slane %v642, 4
      %v649 = vrot.slane %v644, 4
      %v650 = vrot.slane %v646, 4
      %v651 = vsel %vm307, %v647, %v648
      %vm652 = vcmask 769024
      %v653 = vsel %vm652, %v640, %v651
      %v654 = vsel %vm307, %v649, %v650
      %v655 = vsel %vm652, %v644, %v654
      %658 = vst [vmem:[#allocation2 + $0x80] sm:$0xff] %v653
      %659 = vst [vmem:[#allocation2 + $0x88] sm:$0xff] %v655
      %v660 = vld [vmem:[#allocation2] sm:$0xff]
      %v661 = vld [vmem:[#allocation2 + $0x8] sm:$0xff]
      %v662 = vld [vmem:[#allocation2 + $0x10] sm:$0xff]
      %v663 = vld [vmem:[#allocation2 + $0x18] sm:$0xff]
      %v664 = vld [vmem:[#allocation2 + $0x20] sm:$0xff]
      %v665 = vld [vmem:[#allocation2 + $0x28] sm:$0xff]
      %v666 = vld [vmem:[#allocation2 + $0x30] sm:$0xff]
      %v667 = vld [vmem:[#allocation2 + $0x38] sm:$0xff]
      %v668 = vld [vmem:[#allocation2 + $0x40] sm:$0xff]
      %v669 = vld [vmem:[#allocation2 + $0x48] sm:$0xff]
      %v670 = vld [vmem:[#allocation2 + $0x50] sm:$0xff]
      %v671 = vld [vmem:[#allocation2 + $0x58] sm:$0xff]
      %v672 = vld [vmem:[#allocation2 + $0x60] sm:$0xff]
      %v673 = vld [vmem:[#allocation2 + $0x68] sm:$0xff]
      %v674 = vld [vmem:[#allocation2 + $0x70] sm:$0xff]
      %v675 = vld [vmem:[#allocation2 + $0x78] sm:$0xff]
      %v676 = vld [vmem:[#allocation2 + $0x80] sm:$0xff]
      %v677 = vld [vmem:[#allocation2 + $0x88] sm:$0xff]
      %679 = vset.pattern.permute.xlu0 0
      %680 = vperm.xlu0 %679, %v260
      %v681 = vpop.permute.xlu0 %680
      %v684 = vunpack.c.l.b16 %v259
      %v685 = vunpack.c.h.b16 %v259
      %v686 = vpack.c.b16 %v684, %v684
      %v687 = vpack.c.b16 %v685, %v685
      %v707 = vunpack.c.l.b16 %v660
      %v708 = vunpack.c.h.b16 %v660
      %v709 = vunpack.c.l.b16 %v661
      %v710 = vunpack.c.h.b16 %v661
      %v711 = vunpack.c.l.b16 %v662
      %v712 = vunpack.c.h.b16 %v662
      %v713 = vunpack.c.l.b16 %v663
      %v714 = vunpack.c.h.b16 %v663
      %v715 = vunpack.c.l.b16 %v664
      %v716 = vunpack.c.h.b16 %v664
      %v717 = vunpack.c.l.b16 %v665
      %v718 = vunpack.c.h.b16 %v665
      %v719 = vunpack.c.l.b16 %v666
      %v720 = vunpack.c.h.b16 %v666
      %v721 = vunpack.c.l.b16 %v667
      %v722 = vunpack.c.h.b16 %v667
      %v723 = vunpack.c.l.b16 %v668
      %v724 = vunpack.c.h.b16 %v668
      %v725 = vunpack.c.l.b16 %v669
      %v726 = vunpack.c.h.b16 %v669
      %v727 = vunpack.c.l.b16 %v670
      %v728 = vunpack.c.h.b16 %v670
      %v729 = vunpack.c.l.b16 %v671
      %v730 = vunpack.c.h.b16 %v671
      %v731 = vunpack.c.l.b16 %v672
      %v732 = vunpack.c.h.b16 %v672
      %v733 = vunpack.c.l.b16 %v673
      %v734 = vunpack.c.h.b16 %v673
      %v735 = vunpack.c.l.b16 %v674
      %v736 = vunpack.c.h.b16 %v674
      %v737 = vunpack.c.l.b16 %v675
      %v738 = vunpack.c.h.b16 %v675
      %v739 = vunpack.c.l.b16 %v676
      %v740 = vunpack.c.h.b16 %v676
      %v741 = vunpack.c.l.b16 %v677
      %v742 = vunpack.c.h.b16 %v677
      %v743 = vpack.c.b16 %v709, %v707
      %v744 = vpack.c.b16 %v710, %v708
      %v745 = vpack.c.b16 %v713, %v711
      %v746 = vpack.c.b16 %v714, %v712
      %v747 = vpack.c.b16 %v717, %v715
      %v748 = vpack.c.b16 %v718, %v716
      %v749 = vpack.c.b16 %v721, %v719
      %v750 = vpack.c.b16 %v722, %v720
      %v751 = vpack.c.b16 %v725, %v723
      %v752 = vpack.c.b16 %v726, %v724
      %v753 = vpack.c.b16 %v729, %v727
      %v754 = vpack.c.b16 %v730, %v728
      %v755 = vpack.c.b16 %v733, %v731
      %v756 = vpack.c.b16 %v734, %v732
      %v757 = vpack.c.b16 %v737, %v735
      %v758 = vpack.c.b16 %v738, %v736
      %v759 = vpack.c.b16 %v741, %v739
      %v760 = vpack.c.b16 %v742, %v740
      %v780 = vsel %vm400, %v687, 0
      %782 = vmatpush.bf16.msra.mxu0 %v757
      %783 = vmatpush.bf16.msra.mxu0 %v755
      %784 = vmatpush.bf16.msra.mxu0 %v753
      %785 = vmatpush.bf16.msra.mxu0 %v751
      %786 = vmatpush.bf16.msra.mxu0 %v749
      %787 = vmatpush.bf16.msra.mxu0 %v747
      %788 = vmatpush.bf16.msra.mxu0 %v745
      %789 = vmatpush.bf16.msra.mxu0 %v743
      %790 = vmatmul.bf16.gmra.mxu0 %v686
      %v791 = vpop.f32.mrf.mxu0
      %v792 = vadd.f32 %v681, %v791
      %v793 = vpop.f32.mrf.mxu0
      %794 = vdwg.mxu0
      %795 = vmatpush.bf16.msra.mxu0 0
      %796 = vmatpush.bf16.msra.mxu0 0
      %797 = vmatpush.bf16.msra.mxu0 0
      %798 = vmatpush.bf16.msra.mxu0 0
      %799 = vmatpush.bf16.msra.mxu0 0
      %800 = vmatpush.bf16.msra.mxu0 0
      %801 = vmatpush.bf16.msra.mxu0 0
      %802 = vmatpush.bf16.msra.mxu0 %v759
      %803 = vmatmul.bf16.gmra.mxu0 %v780
      %v804 = vpop.f32.mrf.mxu0
      %v805 = vadd.f32 %v792, %v804
      %v806 = vpop.f32.mrf.mxu0
      %807 = vdwg.mxu0
      %808 = vmatpush.bf16.msra.mxu0 %v758
      %809 = vmatpush.bf16.msra.mxu0 %v756
      %810 = vmatpush.bf16.msra.mxu0 %v754
      %811 = vmatpush.bf16.msra.mxu0 %v752
      %812 = vmatpush.bf16.msra.mxu0 %v750
      %813 = vmatpush.bf16.msra.mxu0 %v748
      %814 = vmatpush.bf16.msra.mxu0 %v746
      %815 = vmatpush.bf16.msra.mxu0 %v744
      %816 = vmatmul.bf16.gmra.mxu0 %v686
      %v817 = vpop.f32.mrf.mxu0
      %v818 = vadd.f32 %v681, %v817
      %v819 = vpop.f32.mrf.mxu0
      %820 = vdwg.mxu0
      %821 = vmatpush.bf16.msra.mxu0 0
      %822 = vmatpush.bf16.msra.mxu0 0
      %823 = vmatpush.bf16.msra.mxu0 0
      %824 = vmatpush.bf16.msra.mxu0 0
      %825 = vmatpush.bf16.msra.mxu0 0
      %826 = vmatpush.bf16.msra.mxu0 0
      %827 = vmatpush.bf16.msra.mxu0 0
      %828 = vmatpush.bf16.msra.mxu0 %v760
      %829 = vmatmul.bf16.gmra.mxu0 %v780
      %v830 = vpop.f32.mrf.mxu0
      %v831 = vadd.f32 %v818, %v830
      %v832 = vpop.f32.mrf.mxu0
      %833 = vdwg.mxu0
      %v834 = vmax.f32 %v805, 0.0
      %v835 = vmax.f32 %v831, 0.0
      %836 = vst [vmem:[%s256] sm:$0xff] %v834
      %837 = vst [vmem:[%s256 + $0x8] sm:$0xff] %v835
      %p838 = scmp.lt.s32.totalorder %s19, 1
      %s839 = scalar_select %p838, %s19, 1
      %p840 = scmp.lt.s32.totalorder %s20, 0
      %s841 = scalar_select %p840, %s20, 0
      %s842 = smul.addr %s841, 2
      %s843 = smul.addr %s839, 2
      %s844 = sadd.s32 %s842, %s843
      %s845 = smul.addr %s844, 8
      %s846 = scalar_lea.vmem %s4, %s845
      // Predicated region
      $region37: #{conv_block_forward.1} parent=35 // pred_check
        %p847 = pneg %p146
      $region38: #{conv_block_forward.1} parent=35 // pred_check_branch
        %849 = sbr.rel (%p847) target = $region40
      $region39: #{conv_block_forward.1} parent=35 // pred_region
        _
      $region40: #{conv_block_forward.1} parent=35 // pred_fallthru
        _
    $region36: #{conv_block_forward.1} parent=5 // pred_fallthru
      _
    %p850 = scmp.le.s32.totalorder 2, %s10
    // Predicated region
    $region41: #{conv_block_forward.1} parent=5 // pred_check
      %p851 = pneg %p850
    $region42: #{conv_block_forward.1} parent=5 // pred_check_branch
      %853 = sbr.rel (%p851) target = $region44
    $region43: #{conv_block_forward.1} parent=5 // pred_region
      %s854 = ssub.s32 %s10, 2
      // Predicated region
      $region45: #{conv_block_forward.1} parent=43 // pred_check
        %p855 = pneg %p152
      $region46: #{conv_block_forward.1} parent=43 // pred_check_branch
        %857 = sbr.rel (%p855) target = $region48
      $region47: #{conv_block_forward.1} parent=43 // pred_region
        %p858 = scmp.lt.s32.totalorder %s21, 1
        %s859 = scalar_select %p858, %s21, 1
        %p860 = scmp.lt.s32.totalorder %s22, 0
        %s861 = scalar_select %p860, %s22, 0
        %s862 = smul.addr %s861, 2
        %s863 = smul.addr %s859, 2
        %s864 = sadd.s32 %s862, %s863
        %s865 = smul.addr %s864, 8
        %s866 = scalar_lea.vmem %s4, %s865
      $region48: #{conv_block_forward.1} parent=43 // pred_fallthru
        _
    $region44: #{conv_block_forward.1} parent=5 // pred_fallthru
      _
  $region6: #{conv_block_forward.1} parent=0 // loop_footer
    %s14 = sadd.s32 1, %s10
  $region7: #{conv_block_forward.1} parent=0 // loop_footer_branch
    %9 = sbr.rel target = $region3
  $region8: #{conv_block_forward.1} parent=0 // loop_exit
    _

</llo_original>
